<compile_context>
chip_gen: v5e
topology: v5e:2x2
jax: 0.10.0
libtpu: 0.0.40
codegen_flags: <defaults>
</compile_context>

<pallas_src>
import functools

import jax
import jax.numpy as jnp
from jax.experimental import pallas as pl
from jax.experimental.pallas import tpu as pltpu


def _round_up(x, m):
    return ((x + m - 1) // m) * m


# ----------------------------------------------------------------------------
# Kernel 1: time-parallel input projection + bias
#   x[M, D] @ Wi^T[D, 4C] + b[1, 4C] -> [M, 4C]   (f32 accumulation on the MXU)
# ----------------------------------------------------------------------------
def _input_proj_kernel(x_ref, w_ref, b_ref, o_ref):
    acc = jnp.dot(x_ref[...], w_ref[...], preferred_element_type=jnp.float32)
    o_ref[...] = (acc + b_ref[...]).astype(o_ref.dtype)


def _input_projection(x2d, w_t, bias_row, out_dtype):
    """x2d: [M, K], w_t: [K, N] (compute dtype), bias_row: [1, N] f32."""
    M, K = x2d.shape
    N = w_t.shape[1]

    # Row tiling: pad M up to the tile multiple instead of a full-M fallback.
    if M >= 256:
        tm = 256
        m_pad = _round_up(M, tm)
    else:
        tm = _round_up(M, 8)
        m_pad = tm
    if m_pad != M:
        x2d = jnp.pad(x2d, ((0, m_pad - M), (0, 0)))

    tn = N
    for cand in (1024, 512, 256, 128):
        if N % cand == 0:
            tn = cand
            break

    cost = pl.CostEstimate(
        flops=2 * m_pad * K * N,
        transcendentals=0,
        bytes_accessed=int(
            x2d.dtype.itemsize * m_pad * K * (N // tn)
            + w_t.dtype.itemsize * K * N
            + jnp.dtype(out_dtype).itemsize * m_pad * N),
    )
    out = pl.pallas_call(
        _input_proj_kernel,
        out_shape=jax.ShapeDtypeStruct((m_pad, N), out_dtype),
        grid_spec=pltpu.PrefetchScalarGridSpec(
            num_scalar_prefetch=0,
            grid=(N // tn, m_pad // tm),  # weight tile resident across inner M axis
            in_specs=[
                pl.BlockSpec((tm, K), lambda j, i: (i, 0)),   # activations stream
                pl.BlockSpec((K, tn), lambda j, i: (0, j)),   # weight tile (resident)
                pl.BlockSpec((1, tn), lambda j, i: (0, j)),   # bias tile (resident)
            ],
            out_specs=pl.BlockSpec((tm, tn), lambda j, i: (i, j)),
        ),
        compiler_params=pltpu.CompilerParams(
            dimension_semantics=("parallel", "parallel")),
        cost_estimate=cost,
    )(x2d, w_t, bias_row)
    return out[:M] if m_pad != M else out


# ----------------------------------------------------------------------------
# Kernel 2: sequential recurrence, grid = (batch_shards, time_chunks)
# ----------------------------------------------------------------------------
def _lstm_recurrent_kernel(len_ref, px_ref, ws_ref, wp_ref, h0_ref, c0_ref,
                           out_ref, hf_ref, cf_ref,
                           *, cell_size, chunk, total_timesteps, go_forward,
                           memory_cell_clip_value, state_projection_clip_value):
    g = pl.program_id(1)          # time-chunk index (processing order)

    # Initialize the resident final-state output blocks as the h/c carries.
    @pl.when(g == 0)
    def _():
        hf_ref[...] = h0_ref[...]
        cf_ref[...] = c0_ref[...]

    h = hf_ref[...]               # (Bs, H) f32 carry
    c = cf_ref[...]               # (Bs, C) f32 carry
    ws = ws_ref[...]              # (H, 4C) resident, already in compute dtype
    wp = wp_ref[...]              # (C, H)  resident, already in compute dtype
    lengths = len_ref[...]        # (Bs, 1) int32
    C = cell_size
    base = g * chunk

    # Fully-unrolled static inner loop over the timestep chunk.
    for s in range(chunk):
        if go_forward:
            slot, index = s, base + s
        else:
            slot, index = chunk - 1 - s, (total_timesteps - 1) - (base + s)

        # state linearity (bias already folded into px by kernel 1)
        state_lin = jnp.dot(h.astype(ws.dtype), ws,
                            preferred_element_type=jnp.float32)
        z = px_ref[slot].astype(jnp.float32) + state_lin      # (Bs, 4C)

        input_gate = jax.nn.sigmoid(z[:, 0 * C:1 * C])
        forget_gate = jax.nn.sigmoid(z[:, 1 * C:2 * C])
        memory_init = jnp.tanh(z[:, 2 * C:3 * C])
        output_gate = jax.nn.sigmoid(z[:, 3 * C:4 * C])

        memory = input_gate * memory_init + forget_gate * c
        if memory_cell_clip_value:
            memory = jnp.clip(memory, -memory_cell_clip_value,
                              memory_cell_clip_value)

        pre_projection = output_gate * jnp.tanh(memory)
        timestep_output = jnp.dot(pre_projection.astype(wp.dtype), wp,
                                  preferred_element_type=jnp.float32)
        if state_projection_clip_value:
            timestep_output = jnp.clip(timestep_output,
                                       -state_projection_clip_value,
                                       state_projection_clip_value)

        keep = lengths > index                       # (Bs, 1) bool select
        c = jnp.where(keep, memory, c)
        h = jnp.where(keep, timestep_output, h)

        out_ref[slot] = h.astype(out_ref.dtype)      # per-timestep output

    hf_ref[...] = h                                  # one carry store per chunk
    cf_ref[...] = c


def lstm_cell_with_projection(input_ids, batch_lengths,
                              w_input, w_state, b_state, w_proj,
                              *, go_forward=True,
                              memory_cell_clip_value=None,
                              state_projection_clip_value=None,
                              initial_state=None,
                              compute_dtype=jnp.bfloat16,
                              time_chunk=8,
                              batch_shards=1):
    """ELMo LSTMCellWithProjection forward.

    input_ids:      [B, T, input_size] f32
    batch_lengths:  [B] int
    w_input:        [4*cell, input_size]   (nn.Linear weight, no bias)
    w_state:        [4*cell, hidden]       (+ bias b_state [4*cell])
    w_proj:         [hidden, cell]         (no bias)
    compute_dtype:  matmul operand dtype (bf16 default, f32 accumulation)
    time_chunk:     timesteps per serial grid step (amortizes grid overhead)
    batch_shards:   set 2 on v7x (2 TensorCores); keep 1 on v5e/v6e
    returns (output [B, T, hidden], (h_final [B, hidden], c_final [B, cell]))
    """
    B, T, D = input_ids.shape
    four_c = w_input.shape[0]
    C = four_c // 4
    H = w_state.shape[1]
    assert w_proj.shape == (H, C) and w_state.shape == (four_c, H)
    # NOTE: for lane-aligned gate slices / stores, C and H should be multiples
    # of 128 at production sizes (ELMo: C=4096, H=512 -> fine).

    cd = jnp.dtype(compute_dtype)
    px_dtype = cd                    # streamed projected-input dtype

    # --- padding (batch -> multiple of 8*shards, time -> multiple of chunk) ---
    TK = int(time_chunk)
    B_pad = _round_up(B, 8 * batch_shards)
    Bs = B_pad // batch_shards
    T_pad = _round_up(T, TK)
    nchunks = T_pad // TK

    # --- pre-cast weights ONCE in the wrapper (never inside the kernels) ----
    wi_t = jnp.transpose(w_input).astype(cd)          # [D, 4C]
    ws_t = jnp.transpose(w_state).astype(cd)          # [H, 4C]
    wp_t = jnp.transpose(w_proj).astype(cd)           # [C, H]
    bs_row = b_state.reshape(1, four_c).astype(jnp.float32)

    # --- hoisted time-parallel input projection (+ folded bias) -------------
    x = input_ids.astype(cd)
    if B_pad != B or T_pad != T:
        x = jnp.pad(x, ((0, B_pad - B), (0, T_pad - T), (0, 0)))
    x_tbd = jnp.transpose(x, (1, 0, 2))               # [T_pad, B_pad, D] (small tensor)
    proj_x = _input_projection(x_tbd.reshape(T_pad * B_pad, D), wi_t, bs_row,
                               px_dtype)
    proj_x = proj_x.reshape(T_pad, B_pad, four_c)

    # --- initial state / lengths --------------------------------------------
    if initial_state is None:
        h0 = jnp.zeros((B_pad, H), jnp.float32)
        c0 = jnp.zeros((B_pad, C), jnp.float32)
    else:
        h0 = jnp.pad(initial_state[0].astype(jnp.float32), ((0, B_pad - B), (0, 0)))
        c0 = jnp.pad(initial_state[1].astype(jnp.float32), ((0, B_pad - B), (0, 0)))
    lengths = jnp.pad(batch_lengths.astype(jnp.int32), (0, B_pad - B))
    lengths = lengths.reshape(B_pad, 1)

    # --- time-chunk index maps (grid = (batch_shard, chunk)) ----------------
    if go_forward:
        tmap = lambda b, g: (g, b, 0)
    else:
        tmap = lambda b, g: (nchunks - 1 - g, b, 0)

    kernel = functools.partial(
        _lstm_recurrent_kernel,
        cell_size=C, chunk=TK, total_timesteps=T_pad, go_forward=go_forward,
        memory_cell_clip_value=memory_cell_clip_value,
        state_projection_clip_value=state_projection_clip_value)

    # --- VMEM budget (resident weights + double-buffered streams) -----------
    cd_b = cd.itemsize
    est = (2 * (H * four_c + C * H) * cd_b                       # resident weights
           + 2 * TK * Bs * (four_c * jnp.dtype(px_dtype).itemsize + H * 4)
           + 4 * Bs * (H + C) * 4 + Bs * 4)
    vmem_limit = int(min(64 * 1024 * 1024, max(32 * 1024 * 1024, 2 * est)))

    cost = pl.CostEstimate(
        flops=T_pad * (2 * B_pad * H * four_c + 2 * B_pad * C * H),
        transcendentals=T_pad * B_pad * 5 * C,
        bytes_accessed=int(proj_x.size * proj_x.dtype.itemsize
                           + ws_t.size * ws_t.dtype.itemsize
                           + wp_t.size * wp_t.dtype.itemsize
                           + T_pad * B_pad * H * 4),
    )

    out_tbh, h_final, c_final = pl.pallas_call(
        kernel,
        out_shape=(
            jax.ShapeDtypeStruct((T_pad, B_pad, H), jnp.float32),
            jax.ShapeDtypeStruct((B_pad, H), jnp.float32),
            jax.ShapeDtypeStruct((B_pad, C), jnp.float32),
        ),
        grid_spec=pltpu.PrefetchScalarGridSpec(
            num_scalar_prefetch=0,
            grid=(batch_shards, nchunks),
            in_specs=[
                pl.BlockSpec((Bs, 1), lambda b, g: (b, 0)),          # lengths
                pl.BlockSpec((TK, Bs, four_c), tmap),                # projected input (streams)
                pl.BlockSpec((H, four_c), lambda b, g: (0, 0)),      # W_s^T (resident, bf16)
                pl.BlockSpec((C, H), lambda b, g: (0, 0)),           # W_p^T (resident, bf16)
                pl.BlockSpec((Bs, H), lambda b, g: (b, 0)),          # h0
                pl.BlockSpec((Bs, C), lambda b, g: (b, 0)),          # c0
            ],
            out_specs=(
                pl.BlockSpec((TK, Bs, H), tmap),                     # per-timestep outputs
                pl.BlockSpec((Bs, H), lambda b, g: (b, 0)),          # final h (carry)
                pl.BlockSpec((Bs, C), lambda b, g: (b, 0)),          # final c (carry)
            ),
        ),
        compiler_params=pltpu.CompilerParams(
            dimension_semantics=("parallel", "arbitrary"),
            vmem_limit_bytes=vmem_limit),
        cost_estimate=cost,
    )(lengths, proj_x, ws_t, wp_t, h0, c0)

    # Output is produced time-major; the module contract is batch-major.
    # (Consumers that accept time-major output can skip this transpose.)
    output = jnp.transpose(out_tbh, (1, 0, 2))[:B, :T]
    return output, (h_final[:B], c_final[:B])


# ----------------------------------------------------------------------------
# Plain-JAX reference mirroring the PyTorch forward (for validation only)
# ----------------------------------------------------------------------------
def _reference_lstm(input_ids, batch_lengths, w_input, w_state, b_state, w_proj,
                    go_forward, mclip, sclip):
    B, T, D = input_ids.shape
    H, C = w_proj.shape
    out = jnp.zeros((B, T, H), jnp.float32)
    c = jnp.zeros((B, C), jnp.float32)
    h = jnp.zeros((B, H), jnp.float32)
    for step in range(T):
        index = step if go_forward else T - 1 - step
        x_t = input_ids[:, index]
        z = x_t @ w_input.T + h @ w_state.T + b_state
        i_g = jax.nn.sigmoid(z[:, 0:C])
        f_g = jax.nn.sigmoid(z[:, C:2 * C])
        g = jnp.tanh(z[:, 2 * C:3 * C])
        o_g = jax.nn.sigmoid(z[:, 3 * C:4 * C])
        mem = i_g * g + f_g * c
        if mclip:
            mem = jnp.clip(mem, -mclip, mclip)
        ht = (o_g * jnp.tanh(mem)) @ w_proj.T
        if sclip:
            ht = jnp.clip(ht, -sclip, sclip)
        mask = (batch_lengths > index).astype(jnp.float32)[:, None]
        c = mem * mask + (1 - mask) * c
        h = ht * mask + (1 - mask) * h
        out = out.at[:, index].set(h)
    return out, (h, c)


if __name__ == "__main__":
    # Small config: input_size=32, hidden_size=32, cell_size=128, batch=2, seq=8
    batch, seq = 2, 8
    input_size, hidden_size, cell_size = 32, 32, 128
    mclip, sclip = 3.0, 3.0

    key = jax.random.PRNGKey(0)
    k_x, k_wi, k_ws, k_bs, k_wp = jax.random.split(key, 5)

    input_ids = jax.random.normal(k_x, (batch, seq, input_size), jnp.float32)
    w_input = jax.random.normal(k_wi, (4 * cell_size, input_size), jnp.float32) * 0.1
    w_state = jax.random.normal(k_ws, (4 * cell_size, hidden_size), jnp.float32) * 0.1
    b_state = jax.random.normal(k_bs, (4 * cell_size,), jnp.float32) * 0.1
    w_proj = jax.random.normal(k_wp, (hidden_size, cell_size), jnp.float32) * 0.1
    batch_lengths = jnp.array([8, 5], jnp.int32)   # exercise the padding mask

    # 1) f32 compute path, both directions — tight tolerance.
    for go_forward in (True, False):
        out, (h_f, c_f) = lstm_cell_with_projection(
            input_ids, batch_lengths, w_input, w_state, b_state, w_proj,
            go_forward=go_forward,
            memory_cell_clip_value=mclip,
            state_projection_clip_value=sclip,
            compute_dtype=jnp.float32)
        out = jax.block_until_ready(out)
        ref_out, (ref_h, ref_c) = _reference_lstm(
            input_ids, batch_lengths, w_input, w_state, b_state, w_proj,
            go_forward, mclip, sclip)
        assert jnp.allclose(out, ref_out, atol=2e-3, rtol=2e-3), "f32 output mismatch"
        assert jnp.allclose(h_f, ref_h, atol=2e-3, rtol=2e-3), "f32 final h mismatch"
        assert jnp.allclose(c_f, ref_c, atol=2e-3, rtol=2e-3), "f32 final c mismatch"

    # 2) default bf16 matmuls (f32 accumulation) — looser tolerance.
    out, (h_f, c_f) = lstm_cell_with_projection(
        input_ids, batch_lengths, w_input, w_state, b_state, w_proj,
        go_forward=True,
        memory_cell_clip_value=mclip,
        state_projection_clip_value=sclip)
    out = jax.block_until_ready(out)
    ref_out, (ref_h, ref_c) = _reference_lstm(
        input_ids, batch_lengths, w_input, w_state, b_state, w_proj,
        True, mclip, sclip)
    assert jnp.allclose(out, ref_out, atol=8e-2, rtol=8e-2), "bf16 output mismatch"
    assert jnp.allclose(h_f, ref_h, atol=8e-2, rtol=8e-2), "bf16 final h mismatch"
    assert jnp.allclose(c_f, ref_c, atol=8e-2, rtol=8e-2), "bf16 final c mismatch"

    # 3) ragged shapes (B=3, T=6): exercises batch+time padding and reverse math.
    b2, t2 = 3, 6
    x2 = jax.random.normal(jax.random.PRNGKey(1), (b2, t2, input_size), jnp.float32)
    len2 = jnp.array([6, 3, 1], jnp.int32)
    out2, (h2, c2) = lstm_cell_with_projection(
        x2, len2, w_input, w_state, b_state, w_proj,
        go_forward=False,
        memory_cell_clip_value=mclip,
        state_projection_clip_value=sclip,
        compute_dtype=jnp.float32)
    out2 = jax.block_until_ready(out2)
    r_out2, (r_h2, r_c2) = _reference_lstm(
        x2, len2, w_input, w_state, b_state, w_proj, False, mclip, sclip)
    assert jnp.allclose(out2, r_out2, atol=2e-3, rtol=2e-3), "padded output mismatch"
    assert jnp.allclose(h2, r_h2, atol=2e-3, rtol=2e-3), "padded final h mismatch"
    assert jnp.allclose(c2, r_c2, atol=2e-3, rtol=2e-3), "padded final c mismatch"

    print("KERNEL_OK")
</pallas_src>

<mosaic_0001>
module attributes {stable_mosaic.version = 11 : i64} {
  func.func @_input_proj_kernel(%arg0: i32, %arg1: i32, %arg2: memref<64x32xf32, #tpu.memory_space<vmem>>, %arg3: memref<32x512xf32, #tpu.memory_space<vmem>>, %arg4: memref<1x512xf32, #tpu.memory_space<vmem>>, %arg5: memref<64x512xf32, #tpu.memory_space<vmem>>) attributes {dimension_semantics = [#tpu.dimension_semantics<parallel>, #tpu.dimension_semantics<parallel>], iteration_bounds = array<i64: 1, 1>, scalar_prefetch = 0 : i64, scratch_operands = 0 : i64, tpu.core_type = #tpu.core_type<tc>, window_params = [{transform_indices = @transform_0, window_bounds = array<i64: 64, 32>}, {transform_indices = @transform_1, window_bounds = array<i64: 32, 512>}, {transform_indices = @transform_2, window_bounds = array<i64: 1, 512>}, {transform_indices = @transform_3, window_bounds = array<i64: 64, 512>}]} {
    %c0 = arith.constant 0 : index
    %c0_0 = arith.constant 0 : index
    %0 = vector.load %arg2[%c0, %c0_0] : memref<64x32xf32, #tpu.memory_space<vmem>>, vector<64x32xf32>
    %c0_1 = arith.constant 0 : index
    %c0_2 = arith.constant 0 : index
    %1 = vector.load %arg3[%c0_1, %c0_2] : memref<32x512xf32, #tpu.memory_space<vmem>>, vector<32x512xf32>
    %cst = arith.constant dense<0.000000e+00> : vector<64x512xf32>
    %2 = tpu.matmul %0, %1, %cst {dimension_numbers = #tpu.dot_dimension_numbers<[1], [0], [0], [1], [0, 0, 1, 1], [], []>} : vector<64x32xf32>, vector<32x512xf32>, vector<64x512xf32> -> vector<64x512xf32>
    %c0_3 = arith.constant 0 : index
    %c0_4 = arith.constant 0 : index
    %3 = vector.load %arg4[%c0_3, %c0_4] : memref<1x512xf32, #tpu.memory_space<vmem>>, vector<1x512xf32>
    %4 = vector.broadcast %3 : vector<1x512xf32> to vector<64x512xf32>
    %5 = arith.addf %2, %4 : vector<64x512xf32>
    %c0_5 = arith.constant 0 : index
    %c0_6 = arith.constant 0 : index
    %6 = vector.load %arg5[%c0_5, %c0_6] : memref<64x512xf32, #tpu.memory_space<vmem>>, vector<64x512xf32>
    tpu.vector_store %arg5[%c0_5, %c0_6], %5 {strides = array<i32>} : memref<64x512xf32, #tpu.memory_space<vmem>>, vector<64x512xf32>,
    return
  }
  func.func @transform_0(%arg0: i32, %arg1: i32) -> (i32, i32) {
    %c0_i32 = arith.constant 0 : i32
    %c0_i32_0 = arith.constant 0 : i32
    return %arg1, %c0_i32 : i32, i32
  }
  func.func @transform_1(%arg0: i32, %arg1: i32) -> (i32, i32) {
    %c0_i32 = arith.constant 0 : i32
    %c0_i32_0 = arith.constant 0 : i32
    return %c0_i32, %arg0 : i32, i32
  }
  func.func @transform_2(%arg0: i32, %arg1: i32) -> (i32, i32) {
    %c0_i32 = arith.constant 0 : i32
    %c0_i32_0 = arith.constant 0 : i32
    return %c0_i32, %arg0 : i32, i32
  }
  func.func @transform_3(%arg0: i32, %arg1: i32) -> (i32, i32) {
    %c0_i32 = arith.constant 0 : i32
    return %arg1, %arg0 : i32, i32
  }
}

</mosaic_0001>

<llo_original>
// kernel: tpu_custom_call.1
$region0: #{tpu_custom_call.1}
  #allocation0 [shape = 'u32[]', space=smem, size = 0x4, offset = 0x4, fixed_abs, tag = 'smem constant byte address 0x4 - core index']
  #allocation1 [shape = 'u32[72,128]{1,0:T(1,128)}', space=vmem, size = 0x9000, scoped, tag = 'internal scratch']
  %s0 = inlined_call_operand.vmem [shape: f32[64,32], index: 0, kind: input, shape index: {}]
  %s1 = inlined_call_operand.hbm [shape: f32[32,512], index: 1, kind: input, shape index: {}]
  %s2 = inlined_call_operand.vmem [shape: f32[1,512], index: 2, kind: input, shape index: {}]
  %s3 = inlined_call_operand.hbm [shape: f32[64,512], index: 3, kind: output, shape index: {}]
  %s4 = sld [smem:[#allocation0]]
  $region26: #{tpu_custom_call.1} parent=0
    _
  %s6 = ssub.s32 1, %s4
  %s7 = scalar_select 0, %s6, %s4
  $region1: #{tpu_custom_call.1} parent=0
    #allocation2 [shape = 'u8[65536]{0}', space=vmem, size = 0x10000, scoped, tag = 'input window, operand 1, single buffered']
    #allocation3 [shape = 's32[1]{0}', space=sflag, size = 0x4, scoped, tag = 'scoped memory for tpu_custom_call.1']
    #allocation4 [shape = 's32[1]{0}', space=sflag, size = 0x4, scoped, tag = 'scoped memory for tpu_custom_call.1']
    #allocation5 [shape = 'u8[131072]{0}', space=vmem, size = 0x20000, scoped, tag = 'output window, operand 0, single buffered']
    %8 = vsyncpa [#allocation3], 0
    %9 = vsyncpa [#allocation4], 0
    // Predicated region
    $region2: #{tpu_custom_call.1} parent=1 // pred_check
      _
    $region3: #{tpu_custom_call.1} parent=1 // pred_check_branch
      %11 = sbr.rel (0) target = $region5
    $region4: #{tpu_custom_call.1} parent=1 // pred_region
      _
    $region5: #{tpu_custom_call.1} parent=1 // pred_fallthru
      _
    // Predicated region
    $region6: #{tpu_custom_call.1} parent=1 // pred_check
      _
    $region7: #{tpu_custom_call.1} parent=1 // pred_check_branch
      %13 = sbr.rel (0) target = $region9
    $region8: #{tpu_custom_call.1} parent=1 // pred_region
      %15 = vsyncadd [#allocation3], 0
      %s16 = sshll.u32 %s1, 4
      %s17 = int_to_ptr.hbm [resolvable:$true] %s16
      %s18 = sshll.u32 [#allocation2], 4
      %s19 = int_to_ptr.vmem [resolvable:$true] %s18
      %24 = dma.hbm_to_vmem [thread:$0]  %s17, 2048, %s19, [#allocation3], 512, 512, 32
    $region9: #{tpu_custom_call.1} parent=1 // pred_fallthru
      _
    // Predicated region
    $region10: #{tpu_custom_call.1} parent=1 // pred_check
      _
    $region11: #{tpu_custom_call.1} parent=1 // pred_check_branch
      %26 = sbr.rel (0) target = $region13
    $region12: #{tpu_custom_call.1} parent=1 // pred_region
      _
    $region13: #{tpu_custom_call.1} parent=1 // pred_fallthru
      _
    // Predicated region
    $region14: #{tpu_custom_call.1} parent=1 // pred_check
      _
    $region15: #{tpu_custom_call.1} parent=1 // pred_check_branch
      %28 = sbr.rel (0) target = $region17
    $region16: #{tpu_custom_call.1} parent=1 // pred_region
      %30 = dma.done [#allocation3], 2048
    $region17: #{tpu_custom_call.1} parent=1 // pred_fallthru
      _
    %v31 = vld [vmem:[%s0] sm:$0xff]
    %v32 = vld [vmem:[%s0 + $0x8] sm:$0xff]
    %v33 = vld [vmem:[%s0 + $0x10] sm:$0xff]
    %v34 = vld [vmem:[%s0 + $0x18] sm:$0xff]
    %v35 = vld [vmem:[%s0 + $0x20] sm:$0xff]
    %v36 = vld [vmem:[%s0 + $0x28] sm:$0xff]
    %v37 = vld [vmem:[%s0 + $0x30] sm:$0xff]
    %v38 = vld [vmem:[%s0 + $0x38] sm:$0xff]
    %v39 = vld [vmem:[#allocation2] sm:$0xff]
    %v40 = vld [vmem:[#allocation2 + $0x8] sm:$0xff]
    %v41 = vld [vmem:[#allocation2 + $0x10] sm:$0xff]
    %v42 = vld [vmem:[#allocation2 + $0x18] sm:$0xff]
    %v43 = vld [vmem:[#allocation2 + $0x20] sm:$0xff]
    %v44 = vld [vmem:[#allocation2 + $0x28] sm:$0xff]
    %v45 = vld [vmem:[#allocation2 + $0x30] sm:$0xff]
    %v46 = vld [vmem:[#allocation2 + $0x38] sm:$0xff]
    %v47 = vld [vmem:[#allocation2 + $0x40] sm:$0xff]
    %v48 = vld [vmem:[#allocation2 + $0x48] sm:$0xff]
    %v49 = vld [vmem:[#allocation2 + $0x50] sm:$0xff]
    %v50 = vld [vmem:[#allocation2 + $0x58] sm:$0xff]
    %v51 = vld [vmem:[#allocation2 + $0x60] sm:$0xff]
    %v52 = vld [vmem:[#allocation2 + $0x68] sm:$0xff]
    %v53 = vld [vmem:[#allocation2 + $0x70] sm:$0xff]
    %v54 = vld [vmem:[#allocation2 + $0x78] sm:$0xff]
    %v55 = vld [vmem:[%s2] sm:$0xf]
    %v57 = vperm.slane %v55, 0
    %v58 = vperm.slane %v55, 1
    %v59 = vperm.slane %v55, 2
    %v60 = vperm.slane %v55, 3
    %vm65 = vcmask 261120
    %v67 = vsel %vm65, %v31, 0
    %v70 = vsel %vm65, %v32, 0
    %v73 = vsel %vm65, %v33, 0
    %v76 = vsel %vm65, %v34, 0
    %v79 = vsel %vm65, %v35, 0
    %v82 = vsel %vm65, %v36, 0
    %v85 = vsel %vm65, %v37, 0
    %v88 = vsel %vm65, %v38, 0
    %90 = vmatpush.msra.mxu0 0.0
    %91 = vmatpush.msra.mxu0 0.0
    %92 = vmatpush.msra.mxu0 0.0
    %93 = vmatpush.msra.mxu0 0.0
    %94 = vmatpush.msra.mxu0 0.0
    %95 = vmatpush.msra.mxu0 0.0
    %96 = vmatpush.msra.mxu0 0.0
    %97 = vmatpush.msra.mxu0 0.0
    %98 = vmatpush.msra.mxu0 0.0
    %99 = vmatpush.msra.mxu0 0.0
    %100 = vmatpush.msra.mxu0 0.0
    %101 = vmatpush.msra.mxu0 0.0
    %102 = vmatpush.msra.mxu0 %v51
    %103 = vmatpush.msra.mxu0 %v47
    %104 = vmatpush.msra.mxu0 %v43
    %105 = vmatpush.msra.mxu0 %v39
    %106 = vmatmul.f32.gmra.mxu0 %v67
    %v107 = vpop.f32.mrf.mxu0
    %v108 = vadd.f32 %v57, %v107
    %109 = vmatmul.f32.gmra.mxu0 %v70
    %v110 = vpop.f32.mrf.mxu0
    %v111 = vadd.f32 %v57, %v110
    %112 = vmatmul.f32.gmra.mxu0 %v73
    %v113 = vpop.f32.mrf.mxu0
    %v114 = vadd.f32 %v57, %v113
    %115 = vmatmul.f32.gmra.mxu0 %v76
    %v116 = vpop.f32.mrf.mxu0
    %v117 = vadd.f32 %v57, %v116
    %118 = vmatmul.f32.gmra.mxu0 %v79
    %v119 = vpop.f32.mrf.mxu0
    %v120 = vadd.f32 %v57, %v119
    %121 = vmatmul.f32.gmra.mxu0 %v82
    %v122 = vpop.f32.mrf.mxu0
    %v123 = vadd.f32 %v57, %v122
    %124 = vmatmul.f32.gmra.mxu0 %v85
    %v125 = vpop.f32.mrf.mxu0
    %v126 = vadd.f32 %v57, %v125
    %127 = vmatmul.f32.gmra.mxu0 %v88
    %v128 = vpop.f32.mrf.mxu0
    %v129 = vadd.f32 %v57, %v128
    %130 = vdwg.mxu0
    %131 = vmatpush.msra.mxu0 0.0
    %132 = vmatpush.msra.mxu0 0.0
    %133 = vmatpush.msra.mxu0 0.0
    %134 = vmatpush.msra.mxu0 0.0
    %135 = vmatpush.msra.mxu0 0.0
    %136 = vmatpush.msra.mxu0 0.0
    %137 = vmatpush.msra.mxu0 0.0
    %138 = vmatpush.msra.mxu0 0.0
    %139 = vmatpush.msra.mxu0 0.0
    %140 = vmatpush.msra.mxu0 0.0
    %141 = vmatpush.msra.mxu0 0.0
    %142 = vmatpush.msra.mxu0 0.0
    %143 = vmatpush.msra.mxu0 %v52
    %144 = vmatpush.msra.mxu0 %v48
    %145 = vmatpush.msra.mxu0 %v44
    %146 = vmatpush.msra.mxu0 %v40
    %147 = vmatmul.f32.gmra.mxu0 %v67
    %v148 = vpop.f32.mrf.mxu0
    %v149 = vadd.f32 %v58, %v148
    %150 = vmatmul.f32.gmra.mxu0 %v70
    %v151 = vpop.f32.mrf.mxu0
    %v152 = vadd.f32 %v58, %v151
    %153 = vmatmul.f32.gmra.mxu0 %v73
    %v154 = vpop.f32.mrf.mxu0
    %v155 = vadd.f32 %v58, %v154
    %156 = vmatmul.f32.gmra.mxu0 %v76
    %v157 = vpop.f32.mrf.mxu0
    %v158 = vadd.f32 %v58, %v157
    %159 = vmatmul.f32.gmra.mxu0 %v79
    %v160 = vpop.f32.mrf.mxu0
    %v161 = vadd.f32 %v58, %v160
    %162 = vmatmul.f32.gmra.mxu0 %v82
    %v163 = vpop.f32.mrf.mxu0
    %v164 = vadd.f32 %v58, %v163
    %165 = vmatmul.f32.gmra.mxu0 %v85
    %v166 = vpop.f32.mrf.mxu0
    %v167 = vadd.f32 %v58, %v166
    %168 = vmatmul.f32.gmra.mxu0 %v88
    %v169 = vpop.f32.mrf.mxu0
    %v170 = vadd.f32 %v58, %v169
    %171 = vdwg.mxu0
    %172 = vmatpush.msra.mxu0 0.0
    %173 = vmatpush.msra.mxu0 0.0
    %174 = vmatpush.msra.mxu0 0.0
    %175 = vmatpush.msra.mxu0 0.0
    %176 = vmatpush.msra.mxu0 0.0
    %177 = vmatpush.msra.mxu0 0.0
    %178 = vmatpush.msra.mxu0 0.0
    %179 = vmatpush.msra.mxu0 0.0
    %180 = vmatpush.msra.mxu0 0.0
    %181 = vmatpush.msra.mxu0 0.0
    %182 = vmatpush.msra.mxu0 0.0
    %183 = vmatpush.msra.mxu0 0.0
    %184 = vmatpush.msra.mxu0 %v53
    %185 = vmatpush.msra.mxu0 %v49
    %186 = vmatpush.msra.mxu0 %v45
    %187 = vmatpush.msra.mxu0 %v41
    %188 = vmatmul.f32.gmra.mxu0 %v67
    %v189 = vpop.f32.mrf.mxu0
    %v190 = vadd.f32 %v59, %v189
    %191 = vmatmul.f32.gmra.mxu0 %v70
    %v192 = vpop.f32.mrf.mxu0
    %v193 = vadd.f32 %v59, %v192
    %194 = vmatmul.f32.gmra.mxu0 %v73
    %v195 = vpop.f32.mrf.mxu0
    %v196 = vadd.f32 %v59, %v195
    %197 = vmatmul.f32.gmra.mxu0 %v76
    %v198 = vpop.f32.mrf.mxu0
    %v199 = vadd.f32 %v59, %v198
    %200 = vmatmul.f32.gmra.mxu0 %v79
    %v201 = vpop.f32.mrf.mxu0
    %v202 = vadd.f32 %v59, %v201
    %203 = vmatmul.f32.gmra.mxu0 %v82
    %v204 = vpop.f32.mrf.mxu0
    %v205 = vadd.f32 %v59, %v204
    %206 = vmatmul.f32.gmra.mxu0 %v85
    %v207 = vpop.f32.mrf.mxu0
    %v208 = vadd.f32 %v59, %v207
    %209 = vmatmul.f32.gmra.mxu0 %v88
    %v210 = vpop.f32.mrf.mxu0
    %v211 = vadd.f32 %v59, %v210
    %212 = vdwg.mxu0
    %213 = vmatpush.msra.mxu0 0.0
    %214 = vmatpush.msra.mxu0 0.0
    %215 = vmatpush.msra.mxu0 0.0
    %216 = vmatpush.msra.mxu0 0.0
    %217 = vmatpush.msra.mxu0 0.0
    %218 = vmatpush.msra.mxu0 0.0
    %219 = vmatpush.msra.mxu0 0.0
    %220 = vmatpush.msra.mxu0 0.0
    %221 = vmatpush.msra.mxu0 0.0
    %222 = vmatpush.msra.mxu0 0.0
    %223 = vmatpush.msra.mxu0 0.0
    %224 = vmatpush.msra.mxu0 0.0
    %225 = vmatpush.msra.mxu0 %v54
    %226 = vmatpush.msra.mxu0 %v50
    %227 = vmatpush.msra.mxu0 %v46
    %228 = vmatpush.msra.mxu0 %v42
    %229 = vmatmul.f32.gmra.mxu0 %v67
    %v230 = vpop.f32.mrf.mxu0
    %v231 = vadd.f32 %v60, %v230
    %232 = vmatmul.f32.gmra.mxu0 %v70
    %v233 = vpop.f32.mrf.mxu0
    %v234 = vadd.f32 %v60, %v233
    %235 = vmatmul.f32.gmra.mxu0 %v73
    %v236 = vpop.f32.mrf.mxu0
    %v237 = vadd.f32 %v60, %v236
    %238 = vmatmul.f32.gmra.mxu0 %v76
    %v239 = vpop.f32.mrf.mxu0
    %v240 = vadd.f32 %v60, %v239
    %241 = vmatmul.f32.gmra.mxu0 %v79
    %v242 = vpop.f32.mrf.mxu0
    %v243 = vadd.f32 %v60, %v242
    %244 = vmatmul.f32.gmra.mxu0 %v82
    %v245 = vpop.f32.mrf.mxu0
    %v246 = vadd.f32 %v60, %v245
    %247 = vmatmul.f32.gmra.mxu0 %v85
    %v248 = vpop.f32.mrf.mxu0
    %v249 = vadd.f32 %v60, %v248
    %250 = vmatmul.f32.gmra.mxu0 %v88
    %v251 = vpop.f32.mrf.mxu0
    %v252 = vadd.f32 %v60, %v251
    %253 = vdwg.mxu0
    %254 = vst [vmem:[#allocation5] sm:$0xff] %v108
    %255 = vst [vmem:[#allocation5 + $0x8] sm:$0xff] %v149
    %256 = vst [vmem:[#allocation5 + $0x10] sm:$0xff] %v190
    %257 = vst [vmem:[#allocation5 + $0x18] sm:$0xff] %v231
    %258 = vst [vmem:[#allocation5 + $0x20] sm:$0xff] %v111
    %259 = vst [vmem:[#allocation5 + $0x28] sm:$0xff] %v152
    %260 = vst [vmem:[#allocation5 + $0x30] sm:$0xff] %v193
    %261 = vst [vmem:[#allocation5 + $0x38] sm:$0xff] %v234
    %262 = vst [vmem:[#allocation5 + $0x40] sm:$0xff] %v114
    %263 = vst [vmem:[#allocation5 + $0x48] sm:$0xff] %v155
    %264 = vst [vmem:[#allocation5 + $0x50] sm:$0xff] %v196
    %265 = vst [vmem:[#allocation5 + $0x58] sm:$0xff] %v237
    %266 = vst [vmem:[#allocation5 + $0x60] sm:$0xff] %v117
    %267 = vst [vmem:[#allocation5 + $0x68] sm:$0xff] %v158
    %268 = vst [vmem:[#allocation5 + $0x70] sm:$0xff] %v199
    %269 = vst [vmem:[#allocation5 + $0x78] sm:$0xff] %v240
    %270 = vst [vmem:[#allocation5 + $0x80] sm:$0xff] %v120
    %271 = vst [vmem:[#allocation5 + $0x88] sm:$0xff] %v161
    %272 = vst [vmem:[#allocation5 + $0x90] sm:$0xff] %v202
    %273 = vst [vmem:[#allocation5 + $0x98] sm:$0xff] %v243
    %274 = vst [vmem:[#allocation5 + $0xa0] sm:$0xff] %v123
    %275 = vst [vmem:[#allocation5 + $0xa8] sm:$0xff] %v164
    %276 = vst [vmem:[#allocation5 + $0xb0] sm:$0xff] %v205
    %277 = vst [vmem:[#allocation5 + $0xb8] sm:$0xff] %v246
    %278 = vst [vmem:[#allocation5 + $0xc0] sm:$0xff] %v126
    %279 = vst [vmem:[#allocation5 + $0xc8] sm:$0xff] %v167
    %280 = vst [vmem:[#allocation5 + $0xd0] sm:$0xff] %v208
    %281 = vst [vmem:[#allocation5 + $0xd8] sm:$0xff] %v249
    %282 = vst [vmem:[#allocation5 + $0xe0] sm:$0xff] %v129
    %283 = vst [vmem:[#allocation5 + $0xe8] sm:$0xff] %v170
    %284 = vst [vmem:[#allocation5 + $0xf0] sm:$0xff] %v211
    %285 = vst [vmem:[#allocation5 + $0xf8] sm:$0xff] %v252
    // Predicated region
    $region18: #{tpu_custom_call.1} parent=1 // pred_check
      _
    $region19: #{tpu_custom_call.1} parent=1 // pred_check_branch
      %287 = sbr.rel (0) target = $region21
    $region20: #{tpu_custom_call.1} parent=1 // pred_region
      %289 = vsyncadd [#allocation4], 0
      %s290 = sshll.u32 [#allocation5], 4
      %s291 = int_to_ptr.vmem [resolvable:$true] %s290
      %s292 = sshll.u32 %s3, 4
      %s293 = int_to_ptr.hbm [resolvable:$true] %s292
      %298 = dma.vmem_to_hbm [thread:$0]  %s291, 4096, %s293, [#allocation4], 512, 512, 32
    $region21: #{tpu_custom_call.1} parent=1 // pred_fallthru
      _
    // Predicated region
    $region22: #{tpu_custom_call.1} parent=1 // pred_check
      _
    $region23: #{tpu_custom_call.1} parent=1 // pred_check_branch
      %300 = sbr.rel (0) target = $region25
    $region24: #{tpu_custom_call.1} parent=1 // pred_region
      %302 = dma.done [#allocation4], 4096
    $region25: #{tpu_custom_call.1} parent=1 // pred_fallthru
      _
    %303 = vsyncpa [#allocation3], 1
    %304 = vsyncpa [#allocation4], 1

</llo_original>
